<compile_context>
chip_gen: v5e
topology: v5e:2x2
jax: 0.10.0
libtpu: 0.0.40
codegen_flags: <defaults>
</compile_context>

<pallas_src>
import functools

import jax
import jax.numpy as jnp
import numpy as np
from jax import lax
from jax.experimental import pallas as pl
from jax.experimental.pallas import tpu as pltpu


# ----------------------------- Pallas kernel -------------------------------
def _xpos_kernel(x_ref, cos_ref, sin_ref, o_ref):
    # x_ref, o_ref: (tL, C)  one batch row's tile (batch dim squeezed away)
    # cos_ref:      (tL, C)  duplicate_interleave(cos * scale)
    # sin_ref:      (tL, C)  signed sin table: -sin*scale on even lanes,
    #                        +sin*scale on odd lanes (sign folded in)
    x = x_ref[...]
    c = x.shape[-1]
    # Adjacent-pair neighbours via XLU rolls (off the VALU path).
    nxt = pltpu.roll(x, shift=c - 1, axis=1)   # nxt[j] = x[(j+1) % c]
    prv = pltpu.roll(x, shift=1, axis=1)       # prv[j] = x[(j-1) % c]
    # rotate_every_two: even lanes need x[j+1], odd lanes need x[j-1]; the
    # +/- sign lives in the sin table.  Wrapped lanes are never selected
    # (j=0 is even -> picks nxt, j=c-1 is odd -> picks prv), so the roll
    # wrap-around is harmless.
    lane = lax.broadcasted_iota(jnp.int32, x.shape, dimension=1)
    rot = jnp.where((lane % 2) == 0, nxt, prv)
    out = x * cos_ref[...] + rot * sin_ref[...]
    o_ref[...] = out.astype(o_ref.dtype)


# ------------------------ coefficient precompute (glue) ---------------------
def _xpos_sin_cos_np(head_dim, length, offset, downscale, scale_base):
    """cos_dup, sin_dup (length, head_dim) float32 — faithful to the torch math."""
    d = head_dim
    scale_buf = (np.arange(0, d, 2, dtype=np.float32) + 0.4 * d) / (1.4 * d)  # (D/2,)

    min_pos = -(length + offset) // 2          # python floor-div (matches torch)
    max_pos = length + offset + min_pos
    power = np.arange(min_pos, max_pos, dtype=np.float32) / float(scale_base)
    scale = scale_buf[None, :] ** power[:, None]                              # (L+off, D/2)

    seq_len, dim = scale.shape
    inv_freq = 1.0 / 10000.0 ** (np.arange(0, dim, dtype=np.float32) / dim)
    sinusoid = np.arange(0, seq_len, dtype=np.float32)[:, None] * inv_freq[None, :]
    sin = np.sin(sinusoid)
    cos = np.cos(sinusoid)

    if seq_len > length:
        scale = scale[-length:]
        sin = sin[-length:]
        cos = cos[-length:]
    if downscale:
        scale = 1.0 / scale

    # duplicate_interleave: (L, D/2) -> (L, D), each element repeated twice
    cos_dup = np.repeat(cos * scale, 2, axis=-1).astype(np.float32)
    sin_dup = np.repeat(sin * scale, 2, axis=-1).astype(np.float32)
    return cos_dup, sin_dup


@functools.lru_cache(maxsize=64)
def _xpos_tables_np(head_dim, length, offset, downscale, scale_base):
    """Cached HOST-side tables: cos_dup and the sign-folded sin table (L, D) f32."""
    cos_dup, sin_dup = _xpos_sin_cos_np(head_dim, length, offset, downscale, scale_base)
    # rotate_every_two(x)[2i] = -x[2i+1],  rotate_every_two(x)[2i+1] = +x[2i]:
    # fold the per-lane sign of the rotated term into one signed sin table.
    sign = np.where(np.arange(head_dim) % 2 == 0, np.float32(-1.0), np.float32(1.0))
    sin_comb = (sin_dup * sign[None, :]).astype(np.float32)
    # TODO(synk): on v6e/v7x with bf16 activations a bf16 table path would halve
    # table HBM/VMEM bytes; kept f32 for accuracy (scale**power spans large
    # magnitudes) and for v5e's f32-only VPU.
    return cos_dup.astype(np.float32), sin_comb


# --------------------------------- wrapper ----------------------------------
def _pick_lane_fold(length, head_dim):
    """Largest k dividing `length` with (k*head_dim) % 128 == 0 (dense lanes).
    Never half-folds to a non-128-multiple lane width (masked-vst penalty)."""
    if head_dim % 2 != 0 or head_dim % 128 == 0:
        return 1
    max_k = max(1, 512 // head_dim)
    for k in range(max_k, 1, -1):
        if length % k == 0 and (k * head_dim) % 128 == 0:
            return k
    return 1


def _round8(n):
    return ((n + 7) // 8) * 8


def berp_xpos(x, offset=0, downscale=False, scale_base=512):
    """x: (B, L, D). Returns xPos-rotated x, same shape/dtype."""
    B, L, D = x.shape
    assert D % 2 == 0, "head_dim must be even for xPos / rotate_every_two"

    cos_np, sin_np = _xpos_tables_np(int(D), int(L), int(offset),
                                     bool(downscale), int(scale_base))

    # ---- lane densification: (B, L, D) -> (B, L/k, k*D) --------------------
    # TODO(synk): if profiling shows a materialized relayout copy for D < 128,
    # keep the folded (B, L/k, k*D) layout across adjacent ops instead of
    # reshaping at the kernel boundary.
    k = _pick_lane_fold(L, D)
    Lk, C = L // k, k * D
    xr = x.reshape(B, Lk, C)
    cos_t = jnp.asarray(cos_np.reshape(Lk, C))
    sin_t = jnp.asarray(sin_np.reshape(Lk, C))

    # ---- row-tile selection -------------------------------------------------
    # Largest multiple-of-8 row tile with the (f32-sized) per-array block
    # <= 2 MiB.  Double-buffered pipeline footprint (x + out + cos + sin)
    # then stays ~16 MiB, leaving headroom for compute temporaries under the
    # 40 MiB scoped-VMEM limit on all generations (v7x physical is 64 MiB).
    bytes_per_row = C * 4
    cap_bytes = 2 << 20
    max_rows = max(8, (cap_bytes // bytes_per_row) // 8 * 8)
    tL = Lk if Lk <= max_rows else max_rows

    # v7x shards the parallel grid across 2 TensorCores: avoid odd 1-/3-step
    # grids (50% / 66% utilization) by splitting the row axis when possible.
    num_i = pl.cdiv(Lk, tL)
    if (num_i * B) % 2 == 1 and (num_i * B) < 4 and Lk > 8:
        tL = max(8, _round8(pl.cdiv(Lk, num_i + 1)))
        num_i = pl.cdiv(Lk, tL)

    # Batch is the innermost (fastest-varying) grid axis so the table block
    # index is unchanged across consecutive steps -> tables are DMA'd from
    # HBM once total (per row tile), not once per batch row.
    grid = (num_i, B)

    out = pl.pallas_call(
        _xpos_kernel,
        out_shape=jax.ShapeDtypeStruct((B, Lk, C), x.dtype),
        grid_spec=pltpu.PrefetchScalarGridSpec(
            num_scalar_prefetch=0,
            grid=grid,
            in_specs=[
                # leading size-1 batch dim squeezed -> kernel sees (tL, C)
                pl.BlockSpec((None, tL, C), lambda i, b: (b, i, 0)),   # x
                pl.BlockSpec((tL, C), lambda i, b: (i, 0)),            # cos*scale
                pl.BlockSpec((tL, C), lambda i, b: (i, 0)),            # signed sin*scale
            ],
            out_specs=pl.BlockSpec((None, tL, C), lambda i, b: (b, i, 0)),
        ),
        compiler_params=pltpu.CompilerParams(
            dimension_semantics=("parallel", "parallel"),
            vmem_limit_bytes=40 * 1024 * 1024,
        ),
    )(xr, cos_t, sin_t)
    return out.reshape(B, L, D)


# ---------------------------- pure-JAX reference -----------------------------
def _berp_xpos_ref(x, offset=0, downscale=False, scale_base=512):
    B, L, D = x.shape
    cos_dup, sin_dup = _xpos_sin_cos_np(int(D), int(L), int(offset),
                                        bool(downscale), int(scale_base))
    cos_dup = jnp.asarray(cos_dup)
    sin_dup = jnp.asarray(sin_dup)
    # rotate_every_two, done the straightforward (stack-based) way
    x1 = x[:, :, 0::2]
    x2 = x[:, :, 1::2]
    rot = jnp.stack((-x2, x1), axis=-1).reshape(B, L, D)
    return x * cos_dup[None] + rot * sin_dup[None]


if __name__ == "__main__":
    key = jax.random.PRNGKey(0)

    # Primary shape: batch=2, seq=8, head_dim=32 (matches the module's layout).
    B, L, D = 2, 8, 32
    x = jax.random.normal(key, (B, L, D), dtype=jnp.float32)
    out = jax.block_until_ready(berp_xpos(x, offset=0, downscale=False))
    ref = _berp_xpos_ref(x, offset=0, downscale=False)
    np.testing.assert_allclose(np.asarray(out), np.asarray(ref), rtol=1e-5, atol=1e-5)

    # Second shape exercising offset/downscale and the lane-folding path.
    B2, L2, D2 = 2, 128, 64
    x2 = jax.random.normal(jax.random.PRNGKey(1), (B2, L2, D2), dtype=jnp.float32)
    out2 = jax.block_until_ready(berp_xpos(x2, offset=2, downscale=True))
    ref2 = _berp_xpos_ref(x2, offset=2, downscale=True)
    np.testing.assert_allclose(np.asarray(out2), np.asarray(ref2), rtol=1e-5, atol=1e-5)

    print("KERNEL_OK")
</pallas_src>

<mosaic_0001>
module attributes {stable_mosaic.version = 11 : i64} {
  func.func @_xpos_kernel(%arg0: i32, %arg1: i32, %arg2: memref<1x1x256xf32, #tpu.memory_space<vmem>>, %arg3: memref<1x256xf32, #tpu.memory_space<vmem>>, %arg4: memref<1x256xf32, #tpu.memory_space<vmem>>, %arg5: memref<1x1x256xf32, #tpu.memory_space<vmem>>) attributes {dimension_semantics = [#tpu.dimension_semantics<parallel>, #tpu.dimension_semantics<parallel>], iteration_bounds = array<i64: 1, 2>, scalar_prefetch = 0 : i64, scratch_operands = 0 : i64, tpu.core_type = #tpu.core_type<tc>, window_params = [{transform_indices = @transform_0, window_bounds = array<i64: 1, 1, 256>}, {transform_indices = @transform_1, window_bounds = array<i64: 1, 256>}, {transform_indices = @transform_2, window_bounds = array<i64: 1, 256>}, {transform_indices = @transform_3, window_bounds = array<i64: 1, 1, 256>}]} {
    %c0 = arith.constant 0 : index
    %c0_0 = arith.constant 0 : index
    %c0_1 = arith.constant 0 : index
    %0 = vector.load %arg2[%c0, %c0_0, %c0_1] : memref<1x1x256xf32, #tpu.memory_space<vmem>>, vector<1x1x256xf32>
    %1 = vector.shape_cast %0 : vector<1x1x256xf32> to vector<1x256xf32>
    %c255_i32 = arith.constant 255 : i32
    %2 = tpu.dynamic_rotate %1 by %c255_i32 dim 1 : vector<1x256xf32>, i32 -> vector<1x256xf32>
    %c1_i32 = arith.constant 1 : i32
    %3 = tpu.dynamic_rotate %1 by %c1_i32 dim 1 : vector<1x256xf32>, i32 -> vector<1x256xf32>
    %4 = tpu.iota {dimensions = array<i32: 1>} : vector<1x256xi32>
    %c2_i32 = arith.constant 2 : i32
    %c0_i32 = arith.constant 0 : i32
    %5 = arith.cmpi eq, %c2_i32, %c0_i32 : i32
    %c1_i32_2 = arith.constant 1 : i32
    %6 = arith.select %5, %c1_i32_2, %c2_i32 : i32
    %7 = vector.broadcast %6 : i32 to vector<1x256xi32>
    %8 = arith.remsi %4, %7 : vector<1x256xi32>
    %c0_i32_3 = arith.constant 0 : i32
    %9 = vector.broadcast %c0_i32_3 : i32 to vector<1x256xi32>
    %10 = arith.cmpi ne, %8, %9 : vector<1x256xi32>
    %c0_i32_4 = arith.constant 0 : i32
    %11 = vector.broadcast %c0_i32_4 : i32 to vector<1x256xi32>
    %12 = arith.cmpi slt, %8, %11 : vector<1x256xi32>
    %c0_i32_5 = arith.constant 0 : i32
    %13 = arith.cmpi slt, %6, %c0_i32_5 : i32
    %14 = vector.broadcast %13 : i1 to vector<1x256xi1>
    %15 = vector.broadcast %14 : vector<1x256xi1> to vector<1x256xi1>
    %16 = arith.xori %12, %15 : vector<1x256xi1>
    %17 = arith.andi %16, %10 : vector<1x256xi1>
    %18 = vector.broadcast %6 : i32 to vector<1x256xi32>
    %19 = arith.addi %8, %18 : vector<1x256xi32>
    %20 = arith.select %17, %19, %8 : vector<1x256xi1>, vector<1x256xi32>
    %c0_i32_6 = arith.constant 0 : i32
    %21 = vector.broadcast %c0_i32_6 : i32 to vector<1x256xi32>
    %22 = arith.cmpi eq, %20, %21 : vector<1x256xi32>
    %23 = arith.select %22, %2, %3 : vector<1x256xi1>, vector<1x256xf32>
    %c0_7 = arith.constant 0 : index
    %c0_8 = arith.constant 0 : index
    %24 = vector.load %arg3[%c0_7, %c0_8] : memref<1x256xf32, #tpu.memory_space<vmem>>, vector<1x256xf32>
    %25 = arith.mulf %1, %24 : vector<1x256xf32>
    %c0_9 = arith.constant 0 : index
    %c0_10 = arith.constant 0 : index
    %26 = vector.load %arg4[%c0_9, %c0_10] : memref<1x256xf32, #tpu.memory_space<vmem>>, vector<1x256xf32>
    %27 = arith.mulf %23, %26 : vector<1x256xf32>
    %28 = arith.addf %25, %27 : vector<1x256xf32>
    %c0_11 = arith.constant 0 : index
    %c0_12 = arith.constant 0 : index
    %c0_13 = arith.constant 0 : index
    %29 = vector.load %arg5[%c0_11, %c0_12, %c0_13] : memref<1x1x256xf32, #tpu.memory_space<vmem>>, vector<1x1x256xf32>
    %30 = vector.shape_cast %29 : vector<1x1x256xf32> to vector<1x256xf32>
    %31 = vector.shape_cast %28 : vector<1x256xf32> to vector<1x1x256xf32>
    tpu.vector_store %arg5[%c0_11, %c0_12, %c0_13], %31 {strides = array<i32>} : memref<1x1x256xf32, #tpu.memory_space<vmem>>, vector<1x1x256xf32>,
    return
  }
  func.func @transform_0(%arg0: i32, %arg1: i32) -> (i32, i32, i32) {
    %c0_i32 = arith.constant 0 : i32
    %c0_i32_0 = arith.constant 0 : i32
    return %arg1, %arg0, %c0_i32 : i32, i32, i32
  }
  func.func @transform_1(%arg0: i32, %arg1: i32) -> (i32, i32) {
    %c0_i32 = arith.constant 0 : i32
    %c0_i32_0 = arith.constant 0 : i32
    return %arg0, %c0_i32 : i32, i32
  }
  func.func @transform_2(%arg0: i32, %arg1: i32) -> (i32, i32) {
    %c0_i32 = arith.constant 0 : i32
    %c0_i32_0 = arith.constant 0 : i32
    return %arg0, %c0_i32 : i32, i32
  }
  func.func @transform_3(%arg0: i32, %arg1: i32) -> (i32, i32, i32) {
    %c0_i32 = arith.constant 0 : i32
    %c0_i32_0 = arith.constant 0 : i32
    return %arg1, %arg0, %c0_i32 : i32, i32, i32
  }
}

</mosaic_0001>

<llo_original>
// kernel: tpu_custom_call.1
$region0: #{tpu_custom_call.1}
  #allocation0 [shape = 'u32[]', space=smem, size = 0x4, offset = 0x4, fixed_abs, tag = 'smem constant byte address 0x4 - core index']
  #allocation1 [shape = 'u32[72,128]{1,0:T(1,128)}', space=vmem, size = 0x9000, scoped, tag = 'internal scratch']
  %s0 = inlined_call_operand.hbm [shape: f32[2,1,256], index: 0, kind: input, shape index: {}]
  %s1 = inlined_call_operand.hbm [shape: f32[1,256], index: 1, kind: input, shape index: {}]
  %s2 = inlined_call_operand.hbm [shape: f32[1,256], index: 2, kind: input, shape index: {}]
  %s3 = inlined_call_operand.hbm [shape: f32[2,1,256], index: 3, kind: output, shape index: {}]
  %s4 = sld [smem:[#allocation0]]
  $region57: #{tpu_custom_call.1} parent=0
    _
  %s6 = ssub.s32 1, %s4
  %s7 = scalar_select 0, %s6, %s4
  $region1: #{tpu_custom_call.1} parent=0
    #allocation2 [shape = 'u8[2048]{0}', space=vmem, size = 0x800, scoped, tag = 'input window, operand 0']
    #allocation3 [shape = 's32[2]{0}', space=sflag, size = 0x8, scoped, tag = 'scoped memory for tpu_custom_call.1']
    #allocation4 [shape = 's32[2]{0}', space=sflag, size = 0x8, scoped, tag = 'scoped memory for tpu_custom_call.1']
    #allocation5 [shape = 'u8[1024]{0}', space=vmem, size = 0x400, scoped, tag = 'input window, operand 1, single buffered']
    #allocation6 [shape = 's32[1]{0}', space=sflag, size = 0x4, scoped, tag = 'scoped memory for tpu_custom_call.1']
    #allocation7 [shape = 'u8[1024]{0}', space=vmem, size = 0x400, scoped, tag = 'input window, operand 2, single buffered']
    #allocation8 [shape = 'u8[2048]{0}', space=vmem, size = 0x800, scoped, tag = 'output window, operand 0']
    %8 = vsyncpa [#allocation3], 0
    %s9 = scalar_lea.sflag [#allocation3], 1
    %10 = vsyncpa %s9, 0
    %11 = vsyncpa [#allocation6], 0
    %12 = vsyncpa [#allocation4], 0
    %s13 = scalar_lea.sflag [#allocation4], 1
    %14 = vsyncpa %s13, 0
    loop: start=0, step=1, limit=4
    $region2: #{tpu_custom_call.1} parent=1 // loop_pre_header
      _
    $region3: #{tpu_custom_call.1} parent=1 // loop_header
      %s16 = sphi 0, %s20
      %p17 = scmp.ge.s32.totalorder %s16, 4
      %s23 = sphi 0, %s35
      %s24 = sphi 0, %s31
      %s25 = sphi 0, %s23
      %s26 = sphi 0, %s24
      %s27 = sphi 0, %s25
      %s28 = sphi 0, %s26
      %s40 = sphi 0, %s42
      %s43 = sphi 0, %s40
      %s44 = sphi 0, %s43
      %s60 = sphi 0, %s44
      %s66 = sphi 0, %s68
      %s69 = sphi 0, %s66
      %s70 = sphi 0, %s69
      %s86 = sphi 0, %s70
      %s92 = sphi 0, %s94
      %s95 = sphi 0, %s92
      %s96 = sphi 0, %s95
      %s112 = sphi 0, %s96
      %s120 = sphi 0, %s122
      %s123 = sphi 0, %s120
      %s124 = sphi 0, %s123
      %s140 = sphi 0, %s124
    $region4: #{tpu_custom_call.1} parent=1 // loop_header_branch
      %19 = sbr.rel (%p17) target = $region8
    $region5: #{tpu_custom_call.1} parent=1 // loop_body
      %s21 = ssub.s32 %s16, 1
      %s22 = ssub.s32 %s16, 2
      %s29 = sadd.s32 1, %s24
      %p30 = scmp.ge.s32.totalorder %s29, 2
      %s31 = scalar_select %p30, 0, %s29
      %s32 = sadd.s32 1, %s23
      %s33 = scalar_select %p30, %s32, %s23
      %p34 = scmp.ge.s32.totalorder %s33, 1
      %s35 = scalar_select %p34, 0, %s33
      %s36 = ssub.s32 %s24, %s31
      %s37 = ssub.s32 %s23, %s35
      %s38 = sor.u32 %s36, %s37
      %p39 = scmp.eq.s32.totalorder %s38, 0
      %s41 = sadd.s32 %s40, 1
      %s42 = scalar_select %p39, %s40, %s41
      %p45 = pneg %p39
      %p46 = scmp.eq.s32.totalorder %s16, 1
      %p47 = por %p45, %p46
      %p48 = scmp.ne.s32.totalorder %s40, %s43
      %p49 = scmp.eq.s32.totalorder %s16, 0
      %p50 = por %p48, %p49
      %p51 = scmp.ne.s32.totalorder %s40, %s43
      %p52 = scmp.eq.s32.totalorder %s21, 1
      %p53 = por %p51, %p52
      %p54 = scmp.ne.s32.totalorder %s43, %s44
      %p55 = scmp.eq.s32.totalorder %s21, 0
      %p56 = por %p54, %p55
      %p57 = scmp.ne.s32.totalorder %s43, %s44
      %p58 = scmp.eq.s32.totalorder %s22, 1
      %p59 = por %p57, %p58
      %p61 = scmp.ne.s32.totalorder %s44, %s60
      %p62 = scmp.eq.s32.totalorder %s22, 0
      %p63 = por %p61, %p62
      %s64 = ssub.s32 %s23, %s35
      %p65 = scmp.eq.s32.totalorder %s64, 0
      %s67 = sadd.s32 %s66, 1
      %s68 = scalar_select %p65, %s66, %s67
      %p71 = pneg %p65
      %p72 = scmp.eq.s32.totalorder %s16, 1
      %p73 = por %p71, %p72
      %p74 = scmp.ne.s32.totalorder %s66, %s69
      %p75 = scmp.eq.s32.totalorder %s16, 0
      %p76 = por %p74, %p75
      %p77 = scmp.ne.s32.totalorder %s66, %s69
      %p78 = scmp.eq.s32.totalorder %s21, 1
      %p79 = por %p77, %p78
      %p80 = scmp.ne.s32.totalorder %s69, %s70
      %p81 = scmp.eq.s32.totalorder %s21, 0
      %p82 = por %p80, %p81
      %p83 = scmp.ne.s32.totalorder %s69, %s70
      %p84 = scmp.eq.s32.totalorder %s22, 1
      %p85 = por %p83, %p84
      %p87 = scmp.ne.s32.totalorder %s70, %s86
      %p88 = scmp.eq.s32.totalorder %s22, 0
      %p89 = por %p87, %p88
      %s90 = ssub.s32 %s23, %s35
      %p91 = scmp.eq.s32.totalorder %s90, 0
      %s93 = sadd.s32 %s92, 1
      %s94 = scalar_select %p91, %s92, %s93
      %p97 = pneg %p91
      %p98 = scmp.eq.s32.totalorder %s16, 1
      %p99 = por %p97, %p98
      %p100 = scmp.ne.s32.totalorder %s92, %s95
      %p101 = scmp.eq.s32.totalorder %s16, 0
      %p102 = por %p100, %p101
      %p103 = scmp.ne.s32.totalorder %s92, %s95
      %p104 = scmp.eq.s32.totalorder %s21, 1
      %p105 = por %p103, %p104
      %p106 = scmp.ne.s32.totalorder %s95, %s96
      %p107 = scmp.eq.s32.totalorder %s21, 0
      %p108 = por %p106, %p107
      %p109 = scmp.ne.s32.totalorder %s95, %s96
      %p110 = scmp.eq.s32.totalorder %s22, 1
      %p111 = por %p109, %p110
      %p113 = scmp.ne.s32.totalorder %s96, %s112
      %p114 = scmp.eq.s32.totalorder %s22, 0
      %p115 = por %p113, %p114
      %s116 = ssub.s32 %s24, %s31
      %s117 = ssub.s32 %s23, %s35
      %s118 = sor.u32 %s116, %s117
      %p119 = scmp.eq.s32.totalorder %s118, 0
      %s121 = sadd.s32 %s120, 1
      %s122 = scalar_select %p119, %s120, %s121
      %p125 = pneg %p119
      %p126 = scmp.eq.s32.totalorder %s16, 1
      %p127 = por %p125, %p126
      %p128 = scmp.ne.s32.totalorder %s120, %s123
      %p129 = scmp.eq.s32.totalorder %s16, 0
      %p130 = por %p128, %p129
      %p131 = scmp.ne.s32.totalorder %s120, %s123
      %p132 = scmp.eq.s32.totalorder %s21, 1
      %p133 = por %p131, %p132
      %p134 = scmp.ne.s32.totalorder %s123, %s124
      %p135 = scmp.eq.s32.totalorder %s21, 0
      %p136 = por %p134, %p135
      %p137 = scmp.ne.s32.totalorder %s123, %s124
      %p138 = scmp.eq.s32.totalorder %s22, 1
      %p139 = por %p137, %p138
      %p141 = scmp.ne.s32.totalorder %s124, %s140
      %p142 = scmp.eq.s32.totalorder %s22, 0
      %p143 = por %p141, %p142
      %p144 = scmp.le.s32.totalorder 1, %s16
      %p145 = scmp.lt.s32.totalorder %s16, 3
      %p146 = pnand %p144, %p145
      %p147 = pneg %p146
      // Predicated region
      $region9: #{tpu_custom_call.1} parent=5 // pred_check
        _
      $region10: #{tpu_custom_call.1} parent=5 // pred_check_branch
        %149 = sbr.rel (%p146) target = $region12
      $region11: #{tpu_custom_call.1} parent=5 // pred_region
        %s150 = ssub.s32 %s16, 1
        // Predicated region
        $region13: #{tpu_custom_call.1} parent=11 // pred_check
          %p151 = pneg %p82
        $region14: #{tpu_custom_call.1} parent=11 // pred_check_branch
          %153 = sbr.rel (%p151) target = $region16
        $region15: #{tpu_custom_call.1} parent=11 // pred_region
          %155 = vsyncadd [#allocation6], 0
          %s156 = smul.addr %s25, 2
          %s157 = scalar_lea.hbm %s1, %s156
          %s159 = sshll.u32 %s157, 4
          %s160 = int_to_ptr.hbm [resolvable:$true] %s159
          %s161 = sshll.u32 [#allocation5], 4
          %s162 = int_to_ptr.vmem [resolvable:$true] %s161
          %164 = dma.hbm_to_vmem [thread:$0]  %s160, 32, %s162, [#allocation6]
        $region16: #{tpu_custom_call.1} parent=11 // pred_fallthru
          _
        // Predicated region
        $region17: #{tpu_custom_call.1} parent=11 // pred_check
          %p165 = pneg %p108
        $region18: #{tpu_custom_call.1} parent=11 // pred_check_branch
          %167 = sbr.rel (%p165) target = $region20
        $region19: #{tpu_custom_call.1} parent=11 // pred_region
          %169 = vsyncadd [#allocation6], 0
          %s170 = smul.addr %s25, 2
          %s171 = scalar_lea.hbm %s2, %s170
          %s173 = sshll.u32 %s171, 4
          %s174 = int_to_ptr.hbm [resolvable:$true] %s173
          %s175 = sshll.u32 [#allocation7], 4
          %s176 = int_to_ptr.vmem [resolvable:$true] %s175
          %178 = dma.hbm_to_vmem [thread:$0]  %s174, 32, %s176, [#allocation6]
        $region20: #{tpu_custom_call.1} parent=11 // pred_fallthru
          _
      $region12: #{tpu_custom_call.1} parent=5 // pred_fallthru
        _
      %p179 = scmp.lt.s32.totalorder %s16, 2
      // Predicated region
      $region21: #{tpu_custom_call.1} parent=5 // pred_check
        %p180 = pneg %p179
      $region22: #{tpu_custom_call.1} parent=5 // pred_check_branch
        %182 = sbr.rel (%p180) target = $region24
      $region23: #{tpu_custom_call.1} parent=5 // pred_region
        // Predicated region
        $region25: #{tpu_custom_call.1} parent=23 // pred_check
          %p183 = pneg %p50
        $region26: #{tpu_custom_call.1} parent=23 // pred_check_branch
          %185 = sbr.rel (%p183) target = $region28
        $region27: #{tpu_custom_call.1} parent=23 // pred_region
          %s186 = sand.u32 %s40, 1
          %s187 = scalar_lea.sflag [#allocation3], %s186
          %s188 = sand.u32 %s40, 1
          %s189 = smul.addr %s188, 2
          %s190 = scalar_lea.vmem [#allocation2], %s189
          %192 = vsyncadd %s187, 0
          %s193 = smul.addr %s23, 2
          %s194 = smul.addr %s24, 2
          %s195 = sadd.s32 %s193, %s194
          %s196 = scalar_lea.hbm %s0, %s195
          %s198 = sshll.u32 %s196, 4
          %s199 = int_to_ptr.hbm [resolvable:$true] %s198
          %s200 = sshll.u32 %s190, 4
          %s201 = int_to_ptr.vmem [resolvable:$true] %s200
          %203 = dma.hbm_to_vmem [thread:$0]  %s199, 32, %s201, %s187
        $region28: #{tpu_custom_call.1} parent=23 // pred_fallthru
          _
      $region24: #{tpu_custom_call.1} parent=5 // pred_fallthru
        _
      %p204 = scmp.le.s32.totalorder 1, %s16
      %p205 = scmp.lt.s32.totalorder %s16, 3
      %p206 = pnand %p204, %p205
      %p207 = pneg %p206
      // Predicated region
      $region29: #{tpu_custom_call.1} parent=5 // pred_check
        _
      $region30: #{tpu_custom_call.1} parent=5 // pred_check_branch
        %209 = sbr.rel (%p206) target = $region32
      $region31: #{tpu_custom_call.1} parent=5 // pred_region
        %s210 = ssub.s32 %s16, 1
        %s211 = sand.u32 %s43, 1
        %s212 = scalar_lea.sflag [#allocation3], %s211
        %s213 = sand.u32 %s43, 1
        %s214 = smul.addr %s213, 2
        %s215 = scalar_lea.vmem [#allocation2], %s214
        // Predicated region
        $region33: #{tpu_custom_call.1} parent=31 // pred_check
          %p216 = pneg %p56
        $region34: #{tpu_custom_call.1} parent=31 // pred_check_branch
          %218 = sbr.rel (%p216) target = $region36
        $region35: #{tpu_custom_call.1} parent=31 // pred_region
          %220 = dma.done %s212, 32
        $region36: #{tpu_custom_call.1} parent=31 // pred_fallthru
          _
        // Predicated region
        $region37: #{tpu_custom_call.1} parent=31 // pred_check
          %p221 = pneg %p82
        $region38: #{tpu_custom_call.1} parent=31 // pred_check_branch
          %223 = sbr.rel (%p221) target = $region40
        $region39: #{tpu_custom_call.1} parent=31 // pred_region
          %225 = dma.done [#allocation6], 32
        $region40: #{tpu_custom_call.1} parent=31 // pred_fallthru
          _
        // Predicated region
        $region41: #{tpu_custom_call.1} parent=31 // pred_check
          %p226 = pneg %p108
        $region42: #{tpu_custom_call.1} parent=31 // pred_check_branch
          %228 = sbr.rel (%p226) target = $region44
        $region43: #{tpu_custom_call.1} parent=31 // pred_region
          %230 = dma.done [#allocation6], 32
        $region44: #{tpu_custom_call.1} parent=31 // pred_fallthru
          _
        %s231 = sand.u32 %s43, 1
        %s232 = scalar_lea.sflag [#allocation3], %s231
        %s233 = sand.u32 %s43, 1
        %s234 = smul.addr %s233, 2
        %s235 = scalar_lea.vmem [#allocation2], %s234
        %p236 = pneg %p56
        %p237 = pneg %p53
        %p238 = pneg %p82
        %p239 = pneg %p79
        %p240 = pneg %p108
        %p241 = pneg %p105
        %p242 = pneg %p136
        %p243 = pneg %p133
        %s244 = sand.u32 %s123, 1
        %s245 = scalar_lea.sflag [#allocation4], %s244
        %s246 = sand.u32 %s123, 1
        %s247 = smul.addr %s246, 2
        %s248 = scalar_lea.vmem [#allocation8], %s247
        %v249 = vld [vmem:[%s215] sm:$0x3]
        %v251 = vperm.slane %v249, 0
        %v252 = vperm.slane %v249, 1
        %255 = vrot.lane.b32.xlu0 %v251, 127
        %v256 = vpop.permute.xlu0 %255
        %257 = vrot.lane.b32.xlu0 %v252, 127
        %v258 = vpop.permute.xlu0 %257
        %v259 = vlaneseq
        %v260 = vand.u32 %v259, 127
        %vm261 = vcmp.lt.s32.totalorder %v260, 127
        %v262 = vsel %vm261, %v256, %v258
        %v263 = vsel %vm261, %v258, %v256
        %264 = vrot.lane.b32.xlu0 %v251, 1
        %v265 = vpop.permute.xlu0 %264
        %266 = vrot.lane.b32.xlu0 %v252, 1
        %v267 = vpop.permute.xlu0 %266
        %vm268 = vcmp.lt.s32.totalorder %v260, 1
        %v269 = vsel %vm268, %v265, %v267
        %v270 = vsel %vm268, %v267, %v265
        %v271 = vadd.s32 %v260, 128
        %vm272 = vcmp.lt.s32.totalorder %v260, 0
        %v273 = vsub.s32 0, %v260
        %v274 = vsel %vm272, %v273, %v260
        %v275 = vshrl.u32 %v274, 1
        %v276 = vand.u32 %v274, 1
        %v277 = vsub.s32 0, %v276
        %v278 = vsel %vm272, %v277, %v276
        %vm279 = vcmp.lt.s32.totalorder %v271, 0
        %v280 = vsub.s32 0, %v271
        %v281 = vsel %vm279, %v280, %v271
        %v282 = vshrl.u32 %v281, 1
        %v283 = vand.u32 %v281, 1
        %v284 = vsub.s32 0, %v283
        %v285 = vsel %vm279, %v284, %v283
        %vm286 = vcmp.ne.s32.totalorder %v278, 0
        %vm287 = vcmp.ne.s32.totalorder %v285, 0
        %vm288 = vcmp.lt.s32.totalorder %v278, 0
        %vm289 = vcmp.lt.s32.totalorder %v285, 0
        %vm290 = vmand %vm288, %vm286
        %vm291 = vmand %vm289, %vm287
        %v292 = vadd.s32 %v278, 2
        %v293 = vadd.s32 %v285, 2
        %v294 = vsel %vm290, %v292, %v278
        %v295 = vsel %vm291, %v293, %v285
        %vm296 = vcmp.eq.s32.totalorder %v294, 0
        %vm297 = vcmp.eq.s32.totalorder %v295, 0
        %v298 = vsel %vm296, %v262, %v270
        %v299 = vsel %vm297, %v263, %v269
        %v300 = vld [vmem:[#allocation5] sm:$0x3]
        %v301 = vmul.f32 %v249, %v300
        %v302 = vld [vmem:[#allocation7] sm:$0x3]
        %v304 = vperm.slane %v302, 0
        %v305 = vperm.slane %v302, 1
        %v308 = vmul.f32 %v298, %v304
        %v309 = vmul.f32 %v299, %v305
        %v312 = vrot.slane %v309, 7
        %vm313 = vcmask 1040384
        %v314 = vsel %vm313, %v308, %v312
        %v316 = vadd.f32 %v301, %v314
        %v317 = vlaneseq
        %vm318 = vcmp.ge.s32.totalorder %v317, 0
        %vm319 = vcmp.lt.s32.totalorder %v317, 256
        %vm320 = vmand %vm318, %vm319
        %321 = vst.msk [vmem:[%s248] sm:$0x3] %vm320, %v316
        %s322 = sand.u32 %s123, 1
        %s323 = scalar_lea.sflag [#allocation4], %s322
        %s324 = sand.u32 %s123, 1
        %s325 = smul.addr %s324, 2
        %s326 = scalar_lea.vmem [#allocation8], %s325
        // Predicated region
        $region45: #{tpu_custom_call.1} parent=31 // pred_check
          %p327 = pneg %p133
        $region46: #{tpu_custom_call.1} parent=31 // pred_check_branch
          %329 = sbr.rel (%p327) target = $region48
        $region47: #{tpu_custom_call.1} parent=31 // pred_region
          %331 = vsyncadd %s323, 0
          %s332 = smul.addr %s25, 2
          %s333 = smul.addr %s26, 2
          %s334 = sadd.s32 %s332, %s333
          %s335 = scalar_lea.hbm %s3, %s334
          %s337 = sshll.u32 %s326, 4
          %s338 = int_to_ptr.vmem [resolvable:$true] %s337
          %s339 = sshll.u32 %s335, 4
          %s340 = int_to_ptr.hbm [resolvable:$true] %s339
          %342 = dma.vmem_to_hbm [thread:$0]  %s338, 32, %s340, %s323
        $region48: #{tpu_custom_call.1} parent=31 // pred_fallthru
          _
      $region32: #{tpu_custom_call.1} parent=5 // pred_fallthru
        _
      %p343 = scmp.le.s32.totalorder 2, %s16
      // Predicated region
      $region49: #{tpu_custom_call.1} parent=5 // pred_check
        %p344 = pneg %p343
      $region50: #{tpu_custom_call.1} parent=5 // pred_check_branch
        %346 = sbr.rel (%p344) target = $region52
      $region51: #{tpu_custom_call.1} parent=5 // pred_region
        %s347 = ssub.s32 %s16, 2
        // Predicated region
        $region53: #{tpu_custom_call.1} parent=51 // pred_check
          %p348 = pneg %p139
        $region54: #{tpu_custom_call.1} parent=51 // pred_check_branch
          %350 = sbr.rel (%p348) target = $region56
        $region55: #{tpu_custom_call.1} parent=51 // pred_region
          %s351 = sand.u32 %s124, 1
          %s352 = scalar_lea.sflag [#allocation4], %s351
          %s353 = sand.u32 %s124, 1
          %s354 = smul.addr %s353, 2
          %s355 = scalar_lea.vmem [#allocation8], %s354
          %357 = dma.done %s352, 32
        $region56: #{tpu_custom_call.1} parent=51 // pred_fallthru
          _
      $region52: #{tpu_custom_call.1} parent=5 // pred_fallthru
        _
    $region6: #{tpu_custom_call.1} parent=1 // loop_footer
      %s20 = sadd.s32 1, %s16
    $region7: #{tpu_custom_call.1} parent=1 // loop_footer_branch
      %15 = sbr.rel target = $region3
    $region8: #{tpu_custom_call.1} parent=1 // loop_exit
      _
    %358 = vsyncpa [#allocation3], 1
    %s359 = scalar_lea.sflag [#allocation3], 1
    %360 = vsyncpa %s359, 1
    %361 = vsyncpa [#allocation6], 1
    %362 = vsyncpa [#allocation4], 1
    %s363 = scalar_lea.sflag [#allocation4], 1
    %364 = vsyncpa %s363, 1

</llo_original>
